<compile_context>
chip_gen: v6e
topology: v6e:2x2x1
jax: 0.10.0
libtpu: 0.0.40
codegen_flags: <defaults>
</compile_context>

<pallas_src>
import math

import jax
import jax.numpy as jnp
from jax.experimental import pallas as pl
from jax.experimental.pallas import tpu as pltpu

_INV_SQRT2 = 1.0 / math.sqrt(2.0)


def _round_up(x, m):
    return ((x + m - 1) // m) * m


def _gelu_exact_f32(h):
    # Exact erf-based GELU (nn.GELU() default), computed in f32.
    return 0.5 * h * (1.0 + jax.lax.erf(h * _INV_SQRT2))


# -----------------------------------------------------------------------------
# Kernels
# -----------------------------------------------------------------------------
def _ffn_kernel_single(x_ref, w1_ref, b1_ref, w2_ref, b2_ref, o_ref):
    """Whole hidden dim in one chunk: no accumulator / no re-zeroing needed."""
    h = jnp.dot(x_ref[...], w1_ref[...], preferred_element_type=jnp.float32)
    h = h + b1_ref[...].astype(jnp.float32)
    g = _gelu_exact_f32(h)
    out = jnp.dot(g.astype(w2_ref.dtype), w2_ref[...],
                  preferred_element_type=jnp.float32)
    o_ref[...] = (out + b2_ref[...].astype(jnp.float32)).astype(o_ref.dtype)
    # dropout (eval mode) == identity


def _ffn_kernel_chunked(x_ref, w1_ref, b1_ref, w2_ref, b2_ref, o_ref, acc_ref):
    """Hidden dim streamed in chunks with a resident f32 VMEM accumulator."""
    k = pl.program_id(1)

    @pl.when(k == 0)
    def _():
        acc_ref[...] = jnp.zeros_like(acc_ref)

    # linear_in for this hidden chunk: native-dtype MXU operands, f32 accumulate.
    h = jnp.dot(x_ref[...], w1_ref[...], preferred_element_type=jnp.float32)
    h = h + b1_ref[...].astype(jnp.float32)
    g = _gelu_exact_f32(h)

    # linear_out partial product for this hidden chunk.
    acc_ref[...] += jnp.dot(g.astype(w2_ref.dtype), w2_ref[...],
                            preferred_element_type=jnp.float32)

    @pl.when(k == pl.num_programs(1) - 1)
    def _():
        o_ref[...] = (acc_ref[...] + b2_ref[...].astype(jnp.float32)
                      ).astype(o_ref.dtype)
        # dropout (eval mode) == identity


# -----------------------------------------------------------------------------
# Tile selection / VMEM budgeting
# -----------------------------------------------------------------------------
def _vmem_estimate(tm, th, E_pad, isz_x, isz_w, chunked):
    est = (2 * tm * E_pad * isz_x          # x tiles (double-buffered)
           + 2 * E_pad * th * isz_w        # w1 tiles
           + 2 * th * isz_w                # b1 tiles
           + 2 * th * E_pad * isz_w        # w2 tiles
           + 2 * E_pad * isz_w             # b2 tiles
           + 2 * tm * E_pad * isz_x        # out tiles
           + 2 * tm * th * 4)              # h / g f32 intermediates
    if chunked:
        est += tm * E_pad * 4              # resident f32 accumulator
    return est


def _choose_tiles(M, E_pad, H_pad, isz_x, isz_w, budget_bytes):
    # Largest power-of-two hidden chunk (<= 1024) that divides H_pad.
    th = 128
    for cand in (1024, 512, 256, 128):
        if H_pad % cand == 0:
            th = cand
            break
    # Row tile: large enough to pipeline, 8-aligned, never larger than needed.
    tm = min(512, _round_up(M, 8))

    # Shrink tm first (keeps MXU-friendly th), then th, until VMEM fits.
    def est():
        return _vmem_estimate(tm, th, E_pad, isz_x, isz_w, chunked=(th < H_pad))

    while est() > budget_bytes and tm > 128:
        tm = max(128, _round_up(tm // 2, 8))
    while est() > budget_bytes and th > 128:
        th //= 2  # still divides H_pad (power-of-two chain)
    return tm, th


# -----------------------------------------------------------------------------
# Wrapper
# -----------------------------------------------------------------------------
def feed_forward(x, w1, b1, w2, b2):
    """x: (B, S, E); w1: (E, H); b1: (H,); w2: (H, E); b2: (E,)."""
    B, S, E = x.shape
    H = w1.shape[1]
    M = B * S

    # Lane-dense padding (multiples of 128 on feature axes).
    E_pad = _round_up(E, 128)
    H_pad = _round_up(H, 128)

    isz_x = jnp.dtype(x.dtype).itemsize
    isz_w = jnp.dtype(w1.dtype).itemsize

    budget = 32 * 2**20  # conservative: fits v5e/v6e and v7x's smaller VMEM
    tm, th = _choose_tiles(M, E_pad, H_pad, isz_x, isz_w, budget)
    M_pad = _round_up(M, tm)
    chunked = th < H_pad

    x2d = jnp.pad(x.reshape(M, E), ((0, M_pad - M), (0, E_pad - E)))
    w1p = jnp.pad(w1, ((0, E_pad - E), (0, H_pad - H)))
    b1p = jnp.pad(b1.reshape(1, H), ((0, 0), (0, H_pad - H)))
    w2p = jnp.pad(w2, ((0, H_pad - H), (0, E_pad - E)))
    b2p = jnp.pad(b2.reshape(1, E), ((0, 0), (0, E_pad - E)))

    grid = (M_pad // tm, H_pad // th)

    est = _vmem_estimate(tm, th, E_pad, isz_x, isz_w, chunked)
    vmem_limit = int(min(max(int(1.5 * est), 16 * 2**20), 48 * 2**20))

    cost = pl.CostEstimate(
        flops=4 * M_pad * E_pad * H_pad,          # two matmuls
        transcendentals=M_pad * H_pad,            # erf on the (M, H) tensor
        bytes_accessed=(x2d.size * isz_x + w1p.size * isz_w
                        + b1p.size * isz_w + w2p.size * isz_w
                        + b2p.size * isz_w + M_pad * E_pad * isz_x),
    )

    in_specs = [
        pl.BlockSpec((tm, E_pad), lambda i, k: (i, 0)),   # x row tile
        pl.BlockSpec((E_pad, th), lambda i, k: (0, k)),   # w1 hidden chunk
        pl.BlockSpec((1, th),     lambda i, k: (0, k)),   # b1 hidden chunk
        pl.BlockSpec((th, E_pad), lambda i, k: (k, 0)),   # w2 hidden chunk
        pl.BlockSpec((1, E_pad),  lambda i, k: (0, 0)),   # b2 (constant)
    ]
    out_spec = pl.BlockSpec((tm, E_pad), lambda i, k: (i, 0))

    if chunked:
        kernel = _ffn_kernel_chunked
        scratch = [pltpu.VMEM((tm, E_pad), jnp.float32)]
    else:
        kernel = _ffn_kernel_single
        scratch = []

    out2d = pl.pallas_call(
        kernel,
        out_shape=jax.ShapeDtypeStruct((M_pad, E_pad), x.dtype),
        grid_spec=pltpu.PrefetchScalarGridSpec(
            num_scalar_prefetch=0,
            grid=grid,
            in_specs=in_specs,
            out_specs=out_spec,
            scratch_shapes=scratch,
        ),
        compiler_params=pltpu.CompilerParams(
            dimension_semantics=("parallel", "arbitrary"),
            vmem_limit_bytes=vmem_limit,
        ),
        cost_estimate=cost,
    )(x2d, w1p, b1p, w2p, b2p)

    return out2d[:M, :E].reshape(B, S, E)


def _reference(x, w1, b1, w2, b2):
    h = x @ w1 + b1
    g = 0.5 * h * (1.0 + jax.lax.erf(h / jnp.sqrt(2.0)))
    return g @ w2 + b2


if __name__ == "__main__":
    # Small shapes consistent with the module: batch=2, seq=8, embed=32, hidden=64.
    B, S, E, H = 2, 8, 32, 64

    key = jax.random.PRNGKey(0)
    kx, kw1, kb1, kw2, kb2 = jax.random.split(key, 5)

    x = jax.random.normal(kx, (B, S, E), dtype=jnp.float32)

    # Deterministic parameter init (uniform like PyTorch Linear default bounds).
    lim1 = 1.0 / math.sqrt(E)
    lim2 = 1.0 / math.sqrt(H)
    w1 = jax.random.uniform(kw1, (E, H), minval=-lim1, maxval=lim1, dtype=jnp.float32)
    b1 = jax.random.uniform(kb1, (H,), minval=-lim1, maxval=lim1, dtype=jnp.float32)
    w2 = jax.random.uniform(kw2, (H, E), minval=-lim2, maxval=lim2, dtype=jnp.float32)
    b2 = jax.random.uniform(kb2, (E,), minval=-lim2, maxval=lim2, dtype=jnp.float32)

    out = feed_forward(x, w1, b1, w2, b2)
    out = jax.block_until_ready(out)

    ref = _reference(x, w1, b1, w2, b2)
    assert out.shape == (B, S, E)
    assert jnp.allclose(out, ref, atol=1e-5, rtol=1e-5), "mismatch vs reference"

    print("KERNEL_OK")
</pallas_src>

<mosaic_0001>
module attributes {stable_mosaic.version = 11 : i64} {
  func.func @_ffn_kernel_single(%arg0: i32, %arg1: i32, %arg2: memref<16x128xf32, #tpu.memory_space<vmem>>, %arg3: memref<128x128xf32, #tpu.memory_space<vmem>>, %arg4: memref<1x128xf32, #tpu.memory_space<vmem>>, %arg5: memref<128x128xf32, #tpu.memory_space<vmem>>, %arg6: memref<1x128xf32, #tpu.memory_space<vmem>>, %arg7: memref<16x128xf32, #tpu.memory_space<vmem>>) attributes {dimension_semantics = [#tpu.dimension_semantics<parallel>, #tpu.dimension_semantics<arbitrary>], iteration_bounds = array<i64: 1, 1>, scalar_prefetch = 0 : i64, scratch_operands = 0 : i64, tpu.core_type = #tpu.core_type<tc>, window_params = [{transform_indices = @transform_0, window_bounds = array<i64: 16, 128>}, {transform_indices = @transform_1, window_bounds = array<i64: 128, 128>}, {transform_indices = @transform_2, window_bounds = array<i64: 1, 128>}, {transform_indices = @transform_3, window_bounds = array<i64: 128, 128>}, {pipeline_mode = #tpu.pipeline_mode<synchronous>, transform_indices = @transform_4, window_bounds = array<i64: 1, 128>}, {transform_indices = @transform_5, window_bounds = array<i64: 16, 128>}]} {
    %c0 = arith.constant 0 : index
    %c0_0 = arith.constant 0 : index
    %0 = vector.load %arg2[%c0, %c0_0] : memref<16x128xf32, #tpu.memory_space<vmem>>, vector<16x128xf32>
    %c0_1 = arith.constant 0 : index
    %c0_2 = arith.constant 0 : index
    %1 = vector.load %arg3[%c0_1, %c0_2] : memref<128x128xf32, #tpu.memory_space<vmem>>, vector<128x128xf32>
    %cst = arith.constant dense<0.000000e+00> : vector<16x128xf32>
    %2 = tpu.matmul %0, %1, %cst {dimension_numbers = #tpu.dot_dimension_numbers<[1], [0], [0], [1], [0, 0, 1, 1], [], []>} : vector<16x128xf32>, vector<128x128xf32>, vector<16x128xf32> -> vector<16x128xf32>
    %c0_3 = arith.constant 0 : index
    %c0_4 = arith.constant 0 : index
    %3 = vector.load %arg4[%c0_3, %c0_4] : memref<1x128xf32, #tpu.memory_space<vmem>>, vector<1x128xf32>
    %4 = vector.broadcast %3 : vector<1x128xf32> to vector<16x128xf32>
    %5 = arith.addf %2, %4 : vector<16x128xf32>
    %cst_5 = arith.constant 5.000000e-01 : f32
    %6 = vector.broadcast %cst_5 : f32 to vector<16x128xf32>
    %7 = arith.mulf %6, %5 : vector<16x128xf32>
    %cst_6 = arith.constant 0.707106769 : f32
    %8 = vector.broadcast %cst_6 : f32 to vector<16x128xf32>
    %9 = arith.mulf %5, %8 : vector<16x128xf32>
    %10 = math.erf %9 : vector<16x128xf32>
    %cst_7 = arith.constant 1.000000e+00 : f32
    %11 = vector.broadcast %cst_7 : f32 to vector<16x128xf32>
    %12 = arith.addf %11, %10 : vector<16x128xf32>
    %13 = arith.mulf %7, %12 : vector<16x128xf32>
    %c0_8 = arith.constant 0 : index
    %c0_9 = arith.constant 0 : index
    %14 = vector.load %arg5[%c0_8, %c0_9] : memref<128x128xf32, #tpu.memory_space<vmem>>, vector<128x128xf32>
    %cst_10 = arith.constant dense<0.000000e+00> : vector<16x128xf32>
    %15 = tpu.matmul %13, %14, %cst_10 {dimension_numbers = #tpu.dot_dimension_numbers<[1], [0], [0], [1], [0, 0, 1, 1], [], []>} : vector<16x128xf32>, vector<128x128xf32>, vector<16x128xf32> -> vector<16x128xf32>
    %c0_11 = arith.constant 0 : index
    %c0_12 = arith.constant 0 : index
    %16 = vector.load %arg6[%c0_11, %c0_12] : memref<1x128xf32, #tpu.memory_space<vmem>>, vector<1x128xf32>
    %17 = vector.broadcast %16 : vector<1x128xf32> to vector<16x128xf32>
    %18 = arith.addf %15, %17 : vector<16x128xf32>
    %c0_13 = arith.constant 0 : index
    %c0_14 = arith.constant 0 : index
    %19 = vector.load %arg7[%c0_13, %c0_14] : memref<16x128xf32, #tpu.memory_space<vmem>>, vector<16x128xf32>
    tpu.vector_store %arg7[%c0_13, %c0_14], %18 {strides = array<i32>} : memref<16x128xf32, #tpu.memory_space<vmem>>, vector<16x128xf32>,
    return
  }
  func.func @transform_0(%arg0: i32, %arg1: i32) -> (i32, i32) {
    %c0_i32 = arith.constant 0 : i32
    %c0_i32_0 = arith.constant 0 : i32
    return %arg0, %c0_i32 : i32, i32
  }
  func.func @transform_1(%arg0: i32, %arg1: i32) -> (i32, i32) {
    %c0_i32 = arith.constant 0 : i32
    %c0_i32_0 = arith.constant 0 : i32
    return %c0_i32, %arg1 : i32, i32
  }
  func.func @transform_2(%arg0: i32, %arg1: i32) -> (i32, i32) {
    %c0_i32 = arith.constant 0 : i32
    %c0_i32_0 = arith.constant 0 : i32
    return %c0_i32, %arg1 : i32, i32
  }
  func.func @transform_3(%arg0: i32, %arg1: i32) -> (i32, i32) {
    %c0_i32 = arith.constant 0 : i32
    %c0_i32_0 = arith.constant 0 : i32
    return %arg1, %c0_i32 : i32, i32
  }
  func.func @transform_4(%arg0: i32, %arg1: i32) -> (i32, i32) {
    %c0_i32 = arith.constant 0 : i32
    %c0_i32_0 = arith.constant 0 : i32
    %c0_i32_1 = arith.constant 0 : i32
    return %c0_i32, %c0_i32_0 : i32, i32
  }
  func.func @transform_5(%arg0: i32, %arg1: i32) -> (i32, i32) {
    %c0_i32 = arith.constant 0 : i32
    %c0_i32_0 = arith.constant 0 : i32
    return %arg0, %c0_i32 : i32, i32
  }
}

</mosaic_0001>

<llo_original>
// kernel: tpu_custom_call.1
$region0: #{tpu_custom_call.1}
  #allocation0 [shape = 'u32[]', space=smem, size = 0x4, offset = 0x4, fixed_abs, tag = 'smem constant byte address 0x4 - core index']
  #allocation1 [shape = 'u32[144,128]{1,0:T(1,128)}', space=vmem, size = 0x12000, scoped, tag = 'internal scratch']
  %s0 = inlined_call_operand.hbm [shape: f32[16,128], index: 0, kind: input, shape index: {}]
  %s1 = inlined_call_operand.hbm [shape: f32[128,128], index: 1, kind: input, shape index: {}]
  %s2 = inlined_call_operand.vmem [shape: f32[1,128], index: 2, kind: input, shape index: {}]
  %s3 = inlined_call_operand.hbm [shape: f32[128,128], index: 3, kind: input, shape index: {}]
  %s4 = inlined_call_operand.vmem [shape: f32[1,128], index: 4, kind: input, shape index: {}]
  %s5 = inlined_call_operand.hbm [shape: f32[16,128], index: 5, kind: output, shape index: {}]
  %s6 = sld [smem:[#allocation0]]
  $region42: #{tpu_custom_call.1} parent=0
    _
  %s8 = ssub.s32 1, %s6
  %s9 = scalar_select 0, %s8, %s6
  $region1: #{tpu_custom_call.1} parent=0
    #allocation2 [shape = 'u8[8192]{0}', space=vmem, size = 0x2000, scoped, tag = 'input window, operand 0, single buffered']
    #allocation3 [shape = 's32[1]{0}', space=sflag, size = 0x4, scoped, tag = 'scoped memory for tpu_custom_call.1']
    #allocation4 [shape = 's32[1]{0}', space=sflag, size = 0x4, scoped, tag = 'scoped memory for tpu_custom_call.1']
    #allocation5 [shape = 'u8[65536]{0}', space=vmem, size = 0x10000, scoped, tag = 'input window, operand 1, single buffered']
    #allocation6 [shape = 's32[1]{0}', space=sflag, size = 0x4, scoped, tag = 'scoped memory for tpu_custom_call.1']
    #allocation7 [shape = 'u8[65536]{0}', space=vmem, size = 0x10000, scoped, tag = 'input window, operand 3, single buffered']
    #allocation8 [shape = 'u8[8192]{0}', space=vmem, size = 0x2000, scoped, tag = 'output window, operand 0, single buffered']
    %10 = vsyncpa [#allocation3], 0
    %11 = vsyncpa [#allocation6], 0
    %12 = vsyncpa [#allocation4], 0
    // Predicated region
    $region2: #{tpu_custom_call.1} parent=1 // pred_check
      _
    $region3: #{tpu_custom_call.1} parent=1 // pred_check_branch
      %14 = sbr.rel (0) target = $region5
    $region4: #{tpu_custom_call.1} parent=1 // pred_region
      %s16 = ssub.s32 256, 256
      %17 = vsyncadd [#allocation3], %s16
      %s18 = sshll.u32 [#allocation2], 4
      %s19 = int_to_ptr.vmem [resolvable:$true] %s18
      %24 = dma.hbm_to_vmem [thread:$0]  %s0, 256, %s19, [#allocation3], 128, 128, 8
    $region5: #{tpu_custom_call.1} parent=1 // pred_fallthru
      _
    // Predicated region
    $region6: #{tpu_custom_call.1} parent=1 // pred_check
      _
    $region7: #{tpu_custom_call.1} parent=1 // pred_check_branch
      %26 = sbr.rel (0) target = $region9
    $region8: #{tpu_custom_call.1} parent=1 // pred_region
      %s28 = ssub.s32 2048, 2048
      %29 = vsyncadd [#allocation6], %s28
      %s30 = sshll.u32 [#allocation5], 4
      %s31 = int_to_ptr.vmem [resolvable:$true] %s30
      %36 = dma.hbm_to_vmem [thread:$0]  %s1, 2048, %s31, [#allocation6], 128, 128, 8
    $region9: #{tpu_custom_call.1} parent=1 // pred_fallthru
      _
    // Predicated region
    $region10: #{tpu_custom_call.1} parent=1 // pred_check
      _
    $region11: #{tpu_custom_call.1} parent=1 // pred_check_branch
      %38 = sbr.rel (0) target = $region13
    $region12: #{tpu_custom_call.1} parent=1 // pred_region
      _
    $region13: #{tpu_custom_call.1} parent=1 // pred_fallthru
      _
    // Predicated region
    $region14: #{tpu_custom_call.1} parent=1 // pred_check
      _
    $region15: #{tpu_custom_call.1} parent=1 // pred_check_branch
      %40 = sbr.rel (0) target = $region17
    $region16: #{tpu_custom_call.1} parent=1 // pred_region
      %s42 = ssub.s32 2048, 2048
      %43 = vsyncadd [#allocation6], %s42
      %s44 = sshll.u32 [#allocation7], 4
      %s45 = int_to_ptr.vmem [resolvable:$true] %s44
      %50 = dma.hbm_to_vmem [thread:$0]  %s3, 2048, %s45, [#allocation6], 128, 128, 8
    $region17: #{tpu_custom_call.1} parent=1 // pred_fallthru
      _
    // Predicated region
    $region18: #{tpu_custom_call.1} parent=1 // pred_check
      _
    $region19: #{tpu_custom_call.1} parent=1 // pred_check_branch
      %52 = sbr.rel (0) target = $region21
    $region20: #{tpu_custom_call.1} parent=1 // pred_region
      _
    $region21: #{tpu_custom_call.1} parent=1 // pred_fallthru
      _
    // Predicated region
    $region22: #{tpu_custom_call.1} parent=1 // pred_check
      _
    $region23: #{tpu_custom_call.1} parent=1 // pred_check_branch
      %54 = sbr.rel (0) target = $region25
    $region24: #{tpu_custom_call.1} parent=1 // pred_region
      %55 = dma.done [#allocation3], 256
    $region25: #{tpu_custom_call.1} parent=1 // pred_fallthru
      _
    // Predicated region
    $region26: #{tpu_custom_call.1} parent=1 // pred_check
      _
    $region27: #{tpu_custom_call.1} parent=1 // pred_check_branch
      %57 = sbr.rel (0) target = $region29
    $region28: #{tpu_custom_call.1} parent=1 // pred_region
      %58 = dma.done [#allocation6], 2048
    $region29: #{tpu_custom_call.1} parent=1 // pred_fallthru
      _
    // Predicated region
    $region30: #{tpu_custom_call.1} parent=1 // pred_check
      _
    $region31: #{tpu_custom_call.1} parent=1 // pred_check_branch
      %60 = sbr.rel (0) target = $region33
    $region32: #{tpu_custom_call.1} parent=1 // pred_region
      %61 = dma.done [#allocation6], 2048
    $region33: #{tpu_custom_call.1} parent=1 // pred_fallthru
      _
    %v62 = vld [vmem:[#allocation2] sm:$0xff]
    %v63 = vld [vmem:[#allocation2 + $0x8] sm:$0xff]
    %v64 = vld [vmem:[#allocation5] sm:$0xff]
    %v65 = vld [vmem:[#allocation5 + $0x8] sm:$0xff]
    %v66 = vld [vmem:[#allocation5 + $0x10] sm:$0xff]
    %v67 = vld [vmem:[#allocation5 + $0x18] sm:$0xff]
    %v68 = vld [vmem:[#allocation5 + $0x20] sm:$0xff]
    %v69 = vld [vmem:[#allocation5 + $0x28] sm:$0xff]
    %v70 = vld [vmem:[#allocation5 + $0x30] sm:$0xff]
    %v71 = vld [vmem:[#allocation5 + $0x38] sm:$0xff]
    %v72 = vld [vmem:[#allocation5 + $0x40] sm:$0xff]
    %v73 = vld [vmem:[#allocation5 + $0x48] sm:$0xff]
    %v74 = vld [vmem:[#allocation5 + $0x50] sm:$0xff]
    %v75 = vld [vmem:[#allocation5 + $0x58] sm:$0xff]
    %v76 = vld [vmem:[#allocation5 + $0x60] sm:$0xff]
    %v77 = vld [vmem:[#allocation5 + $0x68] sm:$0xff]
    %v78 = vld [vmem:[#allocation5 + $0x70] sm:$0xff]
    %v79 = vld [vmem:[#allocation5 + $0x78] sm:$0xff]
    %v80 = vld [vmem:[%s2] sm:$0x1]
    %v82 = vlaneseq
    %v83 = vshrl.u32 %v82, 7
    %v84 = vsub.s32 0, %v83
    %v85 = vrot.slane %v80, %v84
    %87 = vmatprep.subr.mxu0 0.0
    %88 = vmatpush1.msra.mxu0 %v79
    %89 = vmatprep.subr.mxu0 0.0
    %90 = vmatpush1.msra.mxu0 %v78
    %91 = vmatprep.subr.mxu0 0.0
    %92 = vmatpush1.msra.mxu0 %v77
    %93 = vmatprep.subr.mxu0 0.0
    %94 = vmatpush1.msra.mxu0 %v76
    %95 = vmatprep.subr.mxu0 0.0
    %96 = vmatpush1.msra.mxu0 %v75
    %97 = vmatprep.subr.mxu0 0.0
    %98 = vmatpush1.msra.mxu0 %v74
    %99 = vmatprep.subr.mxu0 0.0
    %100 = vmatpush1.msra.mxu0 %v73
    %101 = vmatprep.subr.mxu0 0.0
    %102 = vmatpush1.msra.mxu0 %v72
    %103 = vmatprep.subr.mxu0 0.0
    %104 = vmatpush1.msra.mxu0 %v71
    %105 = vmatprep.subr.mxu0 0.0
    %106 = vmatpush1.msra.mxu0 %v70
    %107 = vmatprep.subr.mxu0 0.0
    %108 = vmatpush1.msra.mxu0 %v69
    %109 = vmatprep.subr.mxu0 0.0
    %110 = vmatpush1.msra.mxu0 %v68
    %111 = vmatprep.subr.mxu0 0.0
    %112 = vmatpush1.msra.mxu0 %v67
    %113 = vmatprep.subr.mxu0 0.0
    %114 = vmatpush1.msra.mxu0 %v66
    %115 = vmatprep.subr.mxu0 0.0
    %116 = vmatpush1.msra.mxu0 %v65
    %117 = vmatprep.subr.mxu0 0.0
    %118 = vmatpush1.msra.mxu0 %v64
    %119 = vmatprep.subr.mxu0 0.0
    %120 = vmatpush2.msra.mxu0 0.0
    %121 = vmatprep.subr.mxu0 0.0
    %122 = vmatpush2.msra.mxu0 0.0
    %123 = vmatprep.subr.mxu0 0.0
    %124 = vmatpush2.msra.mxu0 0.0
    %125 = vmatprep.subr.mxu0 0.0
    %126 = vmatpush2.msra.mxu0 0.0
    %127 = vmatprep.subr.mxu0 0.0
    %128 = vmatpush2.msra.mxu0 0.0
    %129 = vmatprep.subr.mxu0 0.0
    %130 = vmatpush2.msra.mxu0 0.0
    %131 = vmatprep.subr.mxu0 0.0
    %132 = vmatpush2.msra.mxu0 0.0
    %133 = vmatprep.subr.mxu0 0.0
    %134 = vmatpush2.msra.mxu0 0.0
    %135 = vmatprep.subr.mxu0 0.0
    %136 = vmatpush2.msra.mxu0 0.0
    %137 = vmatprep.subr.mxu0 0.0
    %138 = vmatpush2.msra.mxu0 0.0
    %139 = vmatprep.subr.mxu0 0.0
    %140 = vmatpush2.msra.mxu0 0.0
    %141 = vmatprep.subr.mxu0 0.0
    %142 = vmatpush2.msra.mxu0 0.0
    %143 = vmatprep.subr.mxu0 0.0
    %144 = vmatpush2.msra.mxu0 0.0
    %145 = vmatprep.subr.mxu0 0.0
    %146 = vmatpush2.msra.mxu0 0.0
    %147 = vmatprep.subr.mxu0 0.0
    %148 = vmatpush2.msra.mxu0 0.0
    %149 = vmatprep.subr.mxu0 0.0
    %150 = vmatpush2.msra.mxu0 0.0
    %151 = vmatprep.mubr.f32.mxu0 0.0
    %152 = vmatmul.mubr.f32.gmra.mxu0 %v62
    %v153 = vpop.f32.mrf.mxu0
    %v154 = vadd.f32 %v85, %v153
    %v155 = vpop.f32.mrf.mxu0
    %156 = vmatprep.mubr.f32.mxu0 0.0
    %157 = vmatmul.mubr.f32.gmra.mxu0 %v63
    %v158 = vpop.f32.mrf.mxu0
    %v159 = vadd.f32 %v85, %v158
    %v160 = vpop.f32.mrf.mxu0
    %161 = vdwg.mxu0
    %v162 = vmul.f32 %v154, 0.5
    %v163 = vmul.f32 %v159, 0.5
    %v164 = vmul.f32 %v154, 0.70710677
    %v165 = vmul.f32 %v159, 0.70710677
    %v166 = verf.f32.pop %v164
    %v167 = verf.f32.pop %v165
    %v168 = vadd.f32 %v166, 1.0
    %v169 = vadd.f32 %v167, 1.0
    %v170 = vmul.f32 %v162, %v168
    %v171 = vmul.f32 %v163, %v169
    %v172 = vld [vmem:[#allocation7] sm:$0xff]
    %v173 = vld [vmem:[#allocation7 + $0x8] sm:$0xff]
    %v174 = vld [vmem:[#allocation7 + $0x10] sm:$0xff]
    %v175 = vld [vmem:[#allocation7 + $0x18] sm:$0xff]
    %v176 = vld [vmem:[#allocation7 + $0x20] sm:$0xff]
    %v177 = vld [vmem:[#allocation7 + $0x28] sm:$0xff]
    %v178 = vld [vmem:[#allocation7 + $0x30] sm:$0xff]
    %v179 = vld [vmem:[#allocation7 + $0x38] sm:$0xff]
    %v180 = vld [vmem:[#allocation7 + $0x40] sm:$0xff]
    %v181 = vld [vmem:[#allocation7 + $0x48] sm:$0xff]
    %v182 = vld [vmem:[#allocation7 + $0x50] sm:$0xff]
    %v183 = vld [vmem:[#allocation7 + $0x58] sm:$0xff]
    %v184 = vld [vmem:[#allocation7 + $0x60] sm:$0xff]
    %v185 = vld [vmem:[#allocation7 + $0x68] sm:$0xff]
    %v186 = vld [vmem:[#allocation7 + $0x70] sm:$0xff]
    %v187 = vld [vmem:[#allocation7 + $0x78] sm:$0xff]
    %v188 = vld [vmem:[%s4] sm:$0x1]
    %v190 = vlaneseq
    %v191 = vshrl.u32 %v190, 7
    %v192 = vsub.s32 0, %v191
    %v193 = vrot.slane %v188, %v192
    %195 = vmatprep.subr.mxu0 0.0
    %196 = vmatpush1.msra.mxu0 %v187
    %197 = vmatprep.subr.mxu0 0.0
    %198 = vmatpush1.msra.mxu0 %v186
    %199 = vmatprep.subr.mxu0 0.0
    %200 = vmatpush1.msra.mxu0 %v185
    %201 = vmatprep.subr.mxu0 0.0
    %202 = vmatpush1.msra.mxu0 %v184
    %203 = vmatprep.subr.mxu0 0.0
    %204 = vmatpush1.msra.mxu0 %v183
    %205 = vmatprep.subr.mxu0 0.0
    %206 = vmatpush1.msra.mxu0 %v182
    %207 = vmatprep.subr.mxu0 0.0
    %208 = vmatpush1.msra.mxu0 %v181
    %209 = vmatprep.subr.mxu0 0.0
    %210 = vmatpush1.msra.mxu0 %v180
    %211 = vmatprep.subr.mxu0 0.0
    %212 = vmatpush1.msra.mxu0 %v179
    %213 = vmatprep.subr.mxu0 0.0
    %214 = vmatpush1.msra.mxu0 %v178
    %215 = vmatprep.subr.mxu0 0.0
    %216 = vmatpush1.msra.mxu0 %v177
    %217 = vmatprep.subr.mxu0 0.0
    %218 = vmatpush1.msra.mxu0 %v176
    %219 = vmatprep.subr.mxu0 0.0
    %220 = vmatpush1.msra.mxu0 %v175
    %221 = vmatprep.subr.mxu0 0.0
    %222 = vmatpush1.msra.mxu0 %v174
    %223 = vmatprep.subr.mxu0 0.0
    %224 = vmatpush1.msra.mxu0 %v173
    %225 = vmatprep.subr.mxu0 0.0
    %226 = vmatpush1.msra.mxu0 %v172
    %227 = vmatprep.subr.mxu0 0.0
    %228 = vmatpush2.msra.mxu0 0.0
    %229 = vmatprep.subr.mxu0 0.0
    %230 = vmatpush2.msra.mxu0 0.0
    %231 = vmatprep.subr.mxu0 0.0
    %232 = vmatpush2.msra.mxu0 0.0
    %233 = vmatprep.subr.mxu0 0.0
    %234 = vmatpush2.msra.mxu0 0.0
    %235 = vmatprep.subr.mxu0 0.0
    %236 = vmatpush2.msra.mxu0 0.0
    %237 = vmatprep.subr.mxu0 0.0
    %238 = vmatpush2.msra.mxu0 0.0
    %239 = vmatprep.subr.mxu0 0.0
    %240 = vmatpush2.msra.mxu0 0.0
    %241 = vmatprep.subr.mxu0 0.0
    %242 = vmatpush2.msra.mxu0 0.0
    %243 = vmatprep.subr.mxu0 0.0
    %244 = vmatpush2.msra.mxu0 0.0
    %245 = vmatprep.subr.mxu0 0.0
    %246 = vmatpush2.msra.mxu0 0.0
    %247 = vmatprep.subr.mxu0 0.0
    %248 = vmatpush2.msra.mxu0 0.0
    %249 = vmatprep.subr.mxu0 0.0
    %250 = vmatpush2.msra.mxu0 0.0
    %251 = vmatprep.subr.mxu0 0.0
    %252 = vmatpush2.msra.mxu0 0.0
    %253 = vmatprep.subr.mxu0 0.0
    %254 = vmatpush2.msra.mxu0 0.0
    %255 = vmatprep.subr.mxu0 0.0
    %256 = vmatpush2.msra.mxu0 0.0
    %257 = vmatprep.subr.mxu0 0.0
    %258 = vmatpush2.msra.mxu0 0.0
    %259 = vmatprep.mubr.f32.mxu0 0.0
    %260 = vmatmul.mubr.f32.gmra.mxu0 %v170
    %v261 = vpop.f32.mrf.mxu0
    %v262 = vadd.f32 %v193, %v261
    %v263 = vpop.f32.mrf.mxu0
    %264 = vmatprep.mubr.f32.mxu0 0.0
    %265 = vmatmul.mubr.f32.gmra.mxu0 %v171
    %v266 = vpop.f32.mrf.mxu0
    %v267 = vadd.f32 %v193, %v266
    %v268 = vpop.f32.mrf.mxu0
    %269 = vdwg.mxu0
    %270 = vst [vmem:[#allocation8] sm:$0xff] %v262
    %271 = vst [vmem:[#allocation8 + $0x8] sm:$0xff] %v267
    // Predicated region
    $region34: #{tpu_custom_call.1} parent=1 // pred_check
      _
    $region35: #{tpu_custom_call.1} parent=1 // pred_check_branch
      %273 = sbr.rel (0) target = $region37
    $region36: #{tpu_custom_call.1} parent=1 // pred_region
      %s275 = ssub.s32 256, 256
      %276 = vsyncadd [#allocation4], %s275
      %s277 = sshll.u32 [#allocation8], 4
      %s278 = int_to_ptr.vmem [resolvable:$true] %s277
      %283 = dma.vmem_to_hbm [thread:$0]  %s278, 256, %s5, [#allocation4], 128, 128, 8
    $region37: #{tpu_custom_call.1} parent=1 // pred_fallthru
      _
    // Predicated region
    $region38: #{tpu_custom_call.1} parent=1 // pred_check
      _
    $region39: #{tpu_custom_call.1} parent=1 // pred_check_branch
      %285 = sbr.rel (0) target = $region41
    $region40: #{tpu_custom_call.1} parent=1 // pred_region
      %286 = dma.done [#allocation4], 256
    $region41: #{tpu_custom_call.1} parent=1 // pred_fallthru
      _
    %287 = vsyncpa [#allocation3], 1
    %288 = vsyncpa [#allocation6], 1
    %289 = vsyncpa [#allocation4], 1

</llo_original>
